<compile_context>
chip_gen: v7x
topology: tpu7x:2x2x1
jax: 0.10.0
libtpu: 0.0.40
codegen_flags: <defaults>
</compile_context>

<pallas_src>
import jax
import jax.numpy as jnp
from jax.experimental import pallas as pl
from jax.experimental.pallas import tpu as pltpu


# ----------------------------- in-kernel math helpers -----------------------------

def _sigmoid(x):
    # Numerically stable sigmoid built from exp + reciprocal (both EUP-friendly).
    e = jnp.exp(-jnp.abs(x))
    inv = pl.reciprocal(1.0 + e)          # exact reciprocal (keeps 1e-5 tolerance)
    return jnp.where(x >= 0, inv, e * inv)


def _softplus(x):
    # softplus(x) = max(x, 0) + log(1 + exp(-|x|))   (numerically stable)
    return jnp.maximum(x, 0.0) + jnp.log(1.0 + jnp.exp(-jnp.abs(x)))


# ----------------------------------- kernel ---------------------------------------

def _make_mixture_kernel(std_factor: float, hw: int, mixture_dim: int):
    sf = float(std_factor)

    def kernel(x_ref, off_ref, pi_ref, mu_ref, sig_ref):
        # Static lane-range slices of the refs (vreg-aligned when hw % 128 == 0).
        def xch(c):
            return x_ref[:, c * hw:(c + 1) * hw].astype(jnp.float32)

        o1 = xch(0)                                                   # (tb, HW)
        cx = xch(1) + off_ref[:, 0:hw].astype(jnp.float32)            # + grid x
        cy = xch(2) + off_ref[:, hw:2 * hw].astype(jnp.float32)       # + grid y
        w = xch(3)
        h = xch(4)

        # pi = sigmoid(o1) normalized over the spatial (lane) axis.
        # Correct only because the block spans the full HW extent.
        s = _sigmoid(o1)
        pi = s * pl.reciprocal(jnp.sum(s, axis=1, keepdims=True))
        pi_ref[...] = pi.astype(pi_ref.dtype)

        # mu: xywh -> ltrb, written channel-by-channel (no concatenation).
        half_w = 0.5 * w
        half_h = 0.5 * h
        mu_ref[:, 0 * hw:1 * hw] = (cx - half_w).astype(mu_ref.dtype)
        mu_ref[:, 1 * hw:2 * hw] = (cy - half_h).astype(mu_ref.dtype)
        mu_ref[:, 2 * hw:3 * hw] = (cx + half_w).astype(mu_ref.dtype)
        mu_ref[:, 3 * hw:4 * hw] = (cy + half_h).astype(mu_ref.dtype)

        # sig = max(softplus(o3_c), std_factor * [w, h, w, h][c]) per channel.
        for c in range(mixture_dim):
            o3c = xch(1 + mixture_dim + c)
            whc = w if (c % 2 == 0) else h
            sig_ref[:, c * hw:(c + 1) * hw] = jnp.maximum(
                _softplus(o3c), sf * whc).astype(sig_ref.dtype)

    return kernel


# ---------------------------------- wrapper ----------------------------------------

def _vmem_capacity_bytes():
    """Best-effort VMEM capacity query; conservative (v7x per-TC) fallback."""
    try:
        info = pltpu.get_tpu_info()
        cap = getattr(info, "vmem_capacity_bytes", None)
        if cap:
            return int(cap)
    except Exception:
        pass
    return 64 * 1024 * 1024


def mixture_module_forward(x, center_offset, *, mixture_dim=4, std_factor=0.05,
                           block_batch=None):
    """Pallas implementation of MixtureModule.forward. Returns (pi, mu, sig)."""
    assert mixture_dim == 4, "xywh->ltrb / wh broadcast require mixture_dim == 4"
    B, C, H, W = x.shape
    assert C == 1 + 2 * mixture_dim
    assert center_offset.shape == (B, 2, H, W)
    HW = H * W
    # HW should be a multiple of 128 so every channel lane-slice is vreg-aligned
    # and every store is a full unmasked vst (it is for typical MDOD map sizes).

    # Lane-major 2-D slabs.  These reshapes only collapse contiguous trailing dims,
    # so they are free views (no extra HBM relayout pass).
    x2d = x.reshape(B, C * HW)
    off2d = center_offset.reshape(B, 2 * HW)

    # --- tile sizing: exact (padding-free) footprint accounting -------------------
    itemsize = jnp.dtype(x.dtype).itemsize
    # per batch-row bytes moved through VMEM: inputs (C + 2) + outputs (1 + 4 + 4)
    row_bytes = (C + 2 + 1 + 2 * mixture_dim) * HW * itemsize
    vmem_cap = _vmem_capacity_bytes()
    # leave ~half of VMEM for compiler scratch / headroom
    vmem_limit = min(vmem_cap // 2, 96 * 1024 * 1024)
    block_budget = (vmem_limit * 5) // 8          # for 2x double-buffered blocks
    tb_budget = max(1, block_budget // (2 * row_bytes))

    if block_batch is not None:
        tb = int(block_batch)
    elif B <= 8:
        tb = B                                    # sublane extent == full dim -> legal
    else:
        # Keep >= 2 (ideally 4) grid steps so the DMA pipeline overlaps and v7x
        # can shard the batch-block axis across both TensorCores.
        steps_target = 4 if B >= 32 else 2
        tb = min(tb_budget, pl.cdiv(B, steps_target), B)
        tb = max(8, (tb // 8) * 8)                # sublane extent multiple of 8
    grid = (pl.cdiv(B, tb),)

    kernel = _make_mixture_kernel(std_factor, HW, mixture_dim)

    out_shape = (
        jax.ShapeDtypeStruct((B, HW), x.dtype),
        jax.ShapeDtypeStruct((B, 4 * HW), x.dtype),
        jax.ShapeDtypeStruct((B, 4 * HW), x.dtype),
    )
    in_specs = [
        pl.BlockSpec((tb, C * HW), lambda b: (b, 0)),
        pl.BlockSpec((tb, 2 * HW), lambda b: (b, 0)),
    ]
    out_specs = (
        pl.BlockSpec((tb, HW), lambda b: (b, 0)),
        pl.BlockSpec((tb, 4 * HW), lambda b: (b, 0)),
        pl.BlockSpec((tb, 4 * HW), lambda b: (b, 0)),
    )

    pi2d, mu2d, sig2d = pl.pallas_call(
        kernel,
        out_shape=out_shape,
        grid=grid,
        in_specs=in_specs,
        out_specs=out_specs,
        compiler_params=pltpu.CompilerParams(
            dimension_semantics=("parallel",),    # batch blocks are independent
            vmem_limit_bytes=vmem_limit,
        ),
    )(x2d, off2d)

    # Contiguous (free) reshapes back to the PyTorch output shapes.
    pi = pi2d.reshape(B, 1, HW)
    mu = mu2d.reshape(B, 4, HW)
    sig = sig2d.reshape(B, 4, HW)
    return pi, mu, sig


# ------------------------- init-time buffer + pure-JAX reference --------------------

def create_xy_map(batch_size, map_size, coord_range):
    # TODO(synk): approximates net_util.create_xy_maps (per-cell center coordinates);
    # exact MDOD grid convention (center vs corner, coord normalization) not in spec.
    H, W = map_size
    ys = (jnp.arange(H, dtype=jnp.float32) + 0.5) * (coord_range[0] / H)
    xs = (jnp.arange(W, dtype=jnp.float32) + 0.5) * (coord_range[1] / W)
    yy, xx = jnp.meshgrid(ys, xs, indexing="ij")
    grid = jnp.stack([xx, yy], axis=0)                        # (2, H, W) -> (x, y)
    return jnp.broadcast_to(grid[None], (batch_size, 2, H, W))


def _reference_mixture(x, center_offset, mixture_dim=4, std_factor=0.05):
    """Pure-JAX mirror of the PyTorch forward for verification."""
    B, C, H, W = x.shape
    x = x.at[:, 1:3].add(center_offset)
    xf = x.reshape(B, C, H * W)
    wh = jnp.concatenate([xf[:, 3:5]] * 2, axis=1)
    o1 = xf[:, 0:1]
    o2 = xf[:, 1:1 + mixture_dim]
    o3 = xf[:, 1 + mixture_dim:1 + 2 * mixture_dim]
    s = jax.nn.sigmoid(o1)
    pi = s / jnp.sum(s, axis=2, keepdims=True)
    cx, cy, w, h = o2[:, 0:1], o2[:, 1:2], o2[:, 2:3], o2[:, 3:4]
    mu = jnp.concatenate([cx - 0.5 * w, cy - 0.5 * h, cx + 0.5 * w, cy + 0.5 * h],
                         axis=1)
    sig = jnp.maximum(jax.nn.softplus(o3), wh * std_factor)
    return pi, mu, sig


# ------------------------------------- demo ----------------------------------------

if __name__ == "__main__":
    B, mixture_dim, H, W = 2, 4, 16, 16
    C = 1 + 2 * mixture_dim                     # 9
    std_factor = 0.05

    key = jax.random.PRNGKey(0)
    x = jax.random.normal(key, (B, C, H, W), dtype=jnp.float32)
    center_offset = create_xy_map(B, (H, W), (1.0, 1.0))

    pi, mu, sig = mixture_module_forward(
        x, center_offset, mixture_dim=mixture_dim, std_factor=std_factor)
    jax.block_until_ready((pi, mu, sig))

    pi_r, mu_r, sig_r = _reference_mixture(
        x, center_offset, mixture_dim=mixture_dim, std_factor=std_factor)

    assert pi.shape == (B, 1, H * W) and mu.shape == (B, 4, H * W)
    assert sig.shape == (B, 4, H * W)
    assert jnp.allclose(pi, pi_r, atol=1e-5, rtol=1e-5)
    assert jnp.allclose(mu, mu_r, atol=1e-5, rtol=1e-5)
    assert jnp.allclose(sig, sig_r, atol=1e-5, rtol=1e-5)

    print("KERNEL_OK")
</pallas_src>

<mosaic_0001>
module attributes {stable_mosaic.version = 11 : i64} {
  func.func @kernel(%arg0: i32, %arg1: memref<2x2304xf32, #tpu.memory_space<vmem>>, %arg2: memref<2x512xf32, #tpu.memory_space<vmem>>, %arg3: memref<2x256xf32, #tpu.memory_space<vmem>>, %arg4: memref<2x1024xf32, #tpu.memory_space<vmem>>, %arg5: memref<2x1024xf32, #tpu.memory_space<vmem>>) attributes {dimension_semantics = [#tpu.dimension_semantics<parallel>], iteration_bounds = array<i64: 1>, scalar_prefetch = 0 : i64, scratch_operands = 0 : i64, tpu.core_type = #tpu.core_type<tc>, window_params = [{transform_indices = @transform_0, window_bounds = array<i64: 2, 2304>}, {transform_indices = @transform_1, window_bounds = array<i64: 2, 512>}, {transform_indices = @transform_2, window_bounds = array<i64: 2, 256>}, {transform_indices = @transform_3, window_bounds = array<i64: 2, 1024>}, {transform_indices = @transform_4, window_bounds = array<i64: 2, 1024>}]} {
    %c0 = arith.constant 0 : index
    %c0_0 = arith.constant 0 : index
    %0 = vector.load %arg1[%c0, %c0_0] : memref<2x2304xf32, #tpu.memory_space<vmem>>, vector<2x256xf32>
    %c0_1 = arith.constant 0 : index
    %c256 = arith.constant 256 : index
    %1 = vector.load %arg1[%c0_1, %c256] : memref<2x2304xf32, #tpu.memory_space<vmem>>, vector<2x256xf32>
    %c0_2 = arith.constant 0 : index
    %c0_3 = arith.constant 0 : index
    %2 = vector.load %arg2[%c0_2, %c0_3] : memref<2x512xf32, #tpu.memory_space<vmem>>, vector<2x256xf32>
    %3 = arith.addf %1, %2 : vector<2x256xf32>
    %c0_4 = arith.constant 0 : index
    %c512 = arith.constant 512 : index
    %4 = vector.load %arg1[%c0_4, %c512] : memref<2x2304xf32, #tpu.memory_space<vmem>>, vector<2x256xf32>
    %c0_5 = arith.constant 0 : index
    %c256_6 = arith.constant 256 : index
    %5 = vector.load %arg2[%c0_5, %c256_6] : memref<2x512xf32, #tpu.memory_space<vmem>>, vector<2x256xf32>
    %6 = arith.addf %4, %5 : vector<2x256xf32>
    %c0_7 = arith.constant 0 : index
    %c768 = arith.constant 768 : index
    %7 = vector.load %arg1[%c0_7, %c768] : memref<2x2304xf32, #tpu.memory_space<vmem>>, vector<2x256xf32>
    %c0_8 = arith.constant 0 : index
    %c1024 = arith.constant 1024 : index
    %8 = vector.load %arg1[%c0_8, %c1024] : memref<2x2304xf32, #tpu.memory_space<vmem>>, vector<2x256xf32>
    %9 = math.absf %0 : vector<2x256xf32>
    %cst = arith.constant 0.000000e+00 : f32
    %10 = vector.broadcast %cst : f32 to vector<2x256xf32>
    %11 = arith.subf %10, %9 : vector<2x256xf32>
    %12 = math.exp %11 : vector<2x256xf32>
    %cst_9 = arith.constant 1.000000e+00 : f32
    %13 = vector.broadcast %cst_9 : f32 to vector<2x256xf32>
    %14 = arith.addf %13, %12 : vector<2x256xf32>
    %15 = tpu.reciprocal %14 : vector<2x256xf32> -> vector<2x256xf32>
    %cst_10 = arith.constant 0.000000e+00 : f32
    %16 = vector.broadcast %cst_10 : f32 to vector<2x256xf32>
    %17 = arith.cmpf oge, %0, %16 : vector<2x256xf32>
    %18 = arith.mulf %12, %15 : vector<2x256xf32>
    %19 = arith.select %17, %15, %18 : vector<2x256xi1>, vector<2x256xf32>
    %cst_11 = arith.constant dense<0.000000e+00> : vector<2xf32>
    %20 = vector.multi_reduction <add>, %19, %cst_11 [1] : vector<2x256xf32> to vector<2xf32>
    %21 = vector.shape_cast %20 : vector<2xf32> to vector<2x1xf32>
    %22 = tpu.reciprocal %21 : vector<2x1xf32> -> vector<2x1xf32>
    %23 = vector.broadcast %22 : vector<2x1xf32> to vector<2x256xf32>
    %24 = arith.mulf %19, %23 : vector<2x256xf32>
    %c0_12 = arith.constant 0 : index
    %c0_13 = arith.constant 0 : index
    %25 = vector.load %arg3[%c0_12, %c0_13] : memref<2x256xf32, #tpu.memory_space<vmem>>, vector<2x256xf32>
    tpu.vector_store %arg3[%c0_12, %c0_13], %24 {strides = array<i32>} : memref<2x256xf32, #tpu.memory_space<vmem>>, vector<2x256xf32>,
    %cst_14 = arith.constant 5.000000e-01 : f32
    %26 = vector.broadcast %cst_14 : f32 to vector<2x256xf32>
    %27 = arith.mulf %26, %7 : vector<2x256xf32>
    %cst_15 = arith.constant 5.000000e-01 : f32
    %28 = vector.broadcast %cst_15 : f32 to vector<2x256xf32>
    %29 = arith.mulf %28, %8 : vector<2x256xf32>
    %30 = arith.subf %3, %27 : vector<2x256xf32>
    %c0_16 = arith.constant 0 : index
    %c0_17 = arith.constant 0 : index
    %31 = vector.load %arg4[%c0_16, %c0_17] : memref<2x1024xf32, #tpu.memory_space<vmem>>, vector<2x256xf32>
    tpu.vector_store %arg4[%c0_16, %c0_17], %30 {strides = array<i32>} : memref<2x1024xf32, #tpu.memory_space<vmem>>, vector<2x256xf32>,
    %32 = arith.subf %6, %29 : vector<2x256xf32>
    %c0_18 = arith.constant 0 : index
    %c256_19 = arith.constant 256 : index
    %33 = vector.load %arg4[%c0_18, %c256_19] : memref<2x1024xf32, #tpu.memory_space<vmem>>, vector<2x256xf32>
    tpu.vector_store %arg4[%c0_18, %c256_19], %32 {strides = array<i32>} : memref<2x1024xf32, #tpu.memory_space<vmem>>, vector<2x256xf32>,
    %34 = arith.addf %3, %27 : vector<2x256xf32>
    %c0_20 = arith.constant 0 : index
    %c512_21 = arith.constant 512 : index
    %35 = vector.load %arg4[%c0_20, %c512_21] : memref<2x1024xf32, #tpu.memory_space<vmem>>, vector<2x256xf32>
    tpu.vector_store %arg4[%c0_20, %c512_21], %34 {strides = array<i32>} : memref<2x1024xf32, #tpu.memory_space<vmem>>, vector<2x256xf32>,
    %36 = arith.addf %6, %29 : vector<2x256xf32>
    %c0_22 = arith.constant 0 : index
    %c768_23 = arith.constant 768 : index
    %37 = vector.load %arg4[%c0_22, %c768_23] : memref<2x1024xf32, #tpu.memory_space<vmem>>, vector<2x256xf32>
    tpu.vector_store %arg4[%c0_22, %c768_23], %36 {strides = array<i32>} : memref<2x1024xf32, #tpu.memory_space<vmem>>, vector<2x256xf32>,
    %c0_24 = arith.constant 0 : index
    %c1280 = arith.constant 1280 : index
    %38 = vector.load %arg1[%c0_24, %c1280] : memref<2x2304xf32, #tpu.memory_space<vmem>>, vector<2x256xf32>
    %cst_25 = arith.constant 0.000000e+00 : f32
    %39 = vector.broadcast %cst_25 : f32 to vector<2x256xf32>
    %40 = arith.maximumf %38, %39 : vector<2x256xf32>
    %41 = math.absf %38 : vector<2x256xf32>
    %cst_26 = arith.constant 0.000000e+00 : f32
    %42 = vector.broadcast %cst_26 : f32 to vector<2x256xf32>
    %43 = arith.subf %42, %41 : vector<2x256xf32>
    %44 = math.exp %43 : vector<2x256xf32>
    %cst_27 = arith.constant 1.000000e+00 : f32
    %45 = vector.broadcast %cst_27 : f32 to vector<2x256xf32>
    %46 = arith.addf %45, %44 : vector<2x256xf32>
    %47 = math.log %46 : vector<2x256xf32>
    %48 = arith.addf %40, %47 : vector<2x256xf32>
    %cst_28 = arith.constant 5.000000e-02 : f32
    %49 = vector.broadcast %cst_28 : f32 to vector<2x256xf32>
    %50 = arith.mulf %49, %7 : vector<2x256xf32>
    %51 = arith.maximumf %48, %50 : vector<2x256xf32>
    %c0_29 = arith.constant 0 : index
    %c0_30 = arith.constant 0 : index
    %52 = vector.load %arg5[%c0_29, %c0_30] : memref<2x1024xf32, #tpu.memory_space<vmem>>, vector<2x256xf32>
    tpu.vector_store %arg5[%c0_29, %c0_30], %51 {strides = array<i32>} : memref<2x1024xf32, #tpu.memory_space<vmem>>, vector<2x256xf32>,
    %c0_31 = arith.constant 0 : index
    %c1536 = arith.constant 1536 : index
    %53 = vector.load %arg1[%c0_31, %c1536] : memref<2x2304xf32, #tpu.memory_space<vmem>>, vector<2x256xf32>
    %cst_32 = arith.constant 0.000000e+00 : f32
    %54 = vector.broadcast %cst_32 : f32 to vector<2x256xf32>
    %55 = arith.maximumf %53, %54 : vector<2x256xf32>
    %56 = math.absf %53 : vector<2x256xf32>
    %cst_33 = arith.constant 0.000000e+00 : f32
    %57 = vector.broadcast %cst_33 : f32 to vector<2x256xf32>
    %58 = arith.subf %57, %56 : vector<2x256xf32>
    %59 = math.exp %58 : vector<2x256xf32>
    %cst_34 = arith.constant 1.000000e+00 : f32
    %60 = vector.broadcast %cst_34 : f32 to vector<2x256xf32>
    %61 = arith.addf %60, %59 : vector<2x256xf32>
    %62 = math.log %61 : vector<2x256xf32>
    %63 = arith.addf %55, %62 : vector<2x256xf32>
    %cst_35 = arith.constant 5.000000e-02 : f32
    %64 = vector.broadcast %cst_35 : f32 to vector<2x256xf32>
    %65 = arith.mulf %64, %8 : vector<2x256xf32>
    %66 = arith.maximumf %63, %65 : vector<2x256xf32>
    %c0_36 = arith.constant 0 : index
    %c256_37 = arith.constant 256 : index
    %67 = vector.load %arg5[%c0_36, %c256_37] : memref<2x1024xf32, #tpu.memory_space<vmem>>, vector<2x256xf32>
    tpu.vector_store %arg5[%c0_36, %c256_37], %66 {strides = array<i32>} : memref<2x1024xf32, #tpu.memory_space<vmem>>, vector<2x256xf32>,
    %c0_38 = arith.constant 0 : index
    %c1792 = arith.constant 1792 : index
    %68 = vector.load %arg1[%c0_38, %c1792] : memref<2x2304xf32, #tpu.memory_space<vmem>>, vector<2x256xf32>
    %cst_39 = arith.constant 0.000000e+00 : f32
    %69 = vector.broadcast %cst_39 : f32 to vector<2x256xf32>
    %70 = arith.maximumf %68, %69 : vector<2x256xf32>
    %71 = math.absf %68 : vector<2x256xf32>
    %cst_40 = arith.constant 0.000000e+00 : f32
    %72 = vector.broadcast %cst_40 : f32 to vector<2x256xf32>
    %73 = arith.subf %72, %71 : vector<2x256xf32>
    %74 = math.exp %73 : vector<2x256xf32>
    %cst_41 = arith.constant 1.000000e+00 : f32
    %75 = vector.broadcast %cst_41 : f32 to vector<2x256xf32>
    %76 = arith.addf %75, %74 : vector<2x256xf32>
    %77 = math.log %76 : vector<2x256xf32>
    %78 = arith.addf %70, %77 : vector<2x256xf32>
    %cst_42 = arith.constant 5.000000e-02 : f32
    %79 = vector.broadcast %cst_42 : f32 to vector<2x256xf32>
    %80 = arith.mulf %79, %7 : vector<2x256xf32>
    %81 = arith.maximumf %78, %80 : vector<2x256xf32>
    %c0_43 = arith.constant 0 : index
    %c512_44 = arith.constant 512 : index
    %82 = vector.load %arg5[%c0_43, %c512_44] : memref<2x1024xf32, #tpu.memory_space<vmem>>, vector<2x256xf32>
    tpu.vector_store %arg5[%c0_43, %c512_44], %81 {strides = array<i32>} : memref<2x1024xf32, #tpu.memory_space<vmem>>, vector<2x256xf32>,
    %c0_45 = arith.constant 0 : index
    %c2048 = arith.constant 2048 : index
    %83 = vector.load %arg1[%c0_45, %c2048] : memref<2x2304xf32, #tpu.memory_space<vmem>>, vector<2x256xf32>
    %cst_46 = arith.constant 0.000000e+00 : f32
    %84 = vector.broadcast %cst_46 : f32 to vector<2x256xf32>
    %85 = arith.maximumf %83, %84 : vector<2x256xf32>
    %86 = math.absf %83 : vector<2x256xf32>
    %cst_47 = arith.constant 0.000000e+00 : f32
    %87 = vector.broadcast %cst_47 : f32 to vector<2x256xf32>
    %88 = arith.subf %87, %86 : vector<2x256xf32>
    %89 = math.exp %88 : vector<2x256xf32>
    %cst_48 = arith.constant 1.000000e+00 : f32
    %90 = vector.broadcast %cst_48 : f32 to vector<2x256xf32>
    %91 = arith.addf %90, %89 : vector<2x256xf32>
    %92 = math.log %91 : vector<2x256xf32>
    %93 = arith.addf %85, %92 : vector<2x256xf32>
    %cst_49 = arith.constant 5.000000e-02 : f32
    %94 = vector.broadcast %cst_49 : f32 to vector<2x256xf32>
    %95 = arith.mulf %94, %8 : vector<2x256xf32>
    %96 = arith.maximumf %93, %95 : vector<2x256xf32>
    %c0_50 = arith.constant 0 : index
    %c768_51 = arith.constant 768 : index
    %97 = vector.load %arg5[%c0_50, %c768_51] : memref<2x1024xf32, #tpu.memory_space<vmem>>, vector<2x256xf32>
    tpu.vector_store %arg5[%c0_50, %c768_51], %96 {strides = array<i32>} : memref<2x1024xf32, #tpu.memory_space<vmem>>, vector<2x256xf32>,
    return
  }
  func.func @transform_0(%arg0: i32) -> (i32, i32) {
    %c0_i32 = arith.constant 0 : i32
    %c0_i32_0 = arith.constant 0 : i32
    return %arg0, %c0_i32 : i32, i32
  }
  func.func @transform_1(%arg0: i32) -> (i32, i32) {
    %c0_i32 = arith.constant 0 : i32
    %c0_i32_0 = arith.constant 0 : i32
    return %arg0, %c0_i32 : i32, i32
  }
  func.func @transform_2(%arg0: i32) -> (i32, i32) {
    %c0_i32 = arith.constant 0 : i32
    %c0_i32_0 = arith.constant 0 : i32
    return %arg0, %c0_i32 : i32, i32
  }
  func.func @transform_3(%arg0: i32) -> (i32, i32) {
    %c0_i32 = arith.constant 0 : i32
    %c0_i32_0 = arith.constant 0 : i32
    return %arg0, %c0_i32 : i32, i32
  }
  func.func @transform_4(%arg0: i32) -> (i32, i32) {
    %c0_i32 = arith.constant 0 : i32
    %c0_i32_0 = arith.constant 0 : i32
    return %arg0, %c0_i32 : i32, i32
  }
}

</mosaic_0001>

<llo_original>
// kernel: tpu_custom_call.1
$region0: #{tpu_custom_call.1}
  #allocation0 [shape = 'u32[]', space=smem, size = 0x4, offset = 0x4, fixed_abs, tag = 'smem constant byte address 0x4 - core index']
  #allocation1 [shape = 'u32[144,128]{1,0:T(1,128)}', space=vmem, size = 0x12000, scoped, tag = 'internal scratch']
  %s0 = inlined_call_operand.hbm [shape: f32[2,2304], index: 0, kind: input, shape index: {}]
  %s1 = inlined_call_operand.hbm [shape: f32[2,512], index: 1, kind: input, shape index: {}]
  %s2 = inlined_call_operand.hbm [shape: f32[2,256], index: 2, kind: output, shape index: {0}]
  %s3 = inlined_call_operand.hbm [shape: f32[2,1024], index: 3, kind: output, shape index: {1}]
  %s4 = inlined_call_operand.hbm [shape: f32[2,1024], index: 4, kind: output, shape index: {2}]
  %5 = xla_tuple %s2, %s3, %s4
  %s6 = sld [smem:[#allocation0]]
  $region42: #{tpu_custom_call.1} parent=0
    _
  %s8 = ssub.s32 1, %s6
  %s9 = scalar_select 0, %s8, %s6
  $region1: #{tpu_custom_call.1} parent=0
    #allocation2 [shape = 'u8[18432]{0}', space=vmem, size = 0x4800, scoped, tag = 'input window, operand 0, single buffered']
    #allocation3 [shape = 's32[1]{0}', space=sflag, size = 0x4, scoped, tag = 'scoped memory for tpu_custom_call.1']
    #allocation4 [shape = 's32[1]{0}', space=sflag, size = 0x4, scoped, tag = 'scoped memory for tpu_custom_call.1']
    #allocation5 [shape = 'u8[4096]{0}', space=vmem, size = 0x1000, scoped, tag = 'input window, operand 1, single buffered']
    #allocation6 [shape = 's32[1]{0}', space=sflag, size = 0x4, scoped, tag = 'scoped memory for tpu_custom_call.1']
    #allocation7 [shape = 'u8[2048]{0}', space=vmem, size = 0x800, scoped, tag = 'output window, operand 0, single buffered']
    #allocation8 [shape = 'u8[8192]{0}', space=vmem, size = 0x2000, scoped, tag = 'output window, operand 1, single buffered']
    #allocation9 [shape = 's32[1]{0}', space=sflag, size = 0x4, scoped, tag = 'scoped memory for tpu_custom_call.1']
    #allocation10 [shape = 'u8[8192]{0}', space=vmem, size = 0x2000, scoped, tag = 'output window, operand 2, single buffered']
    %10 = vsyncpa [#allocation3], 0
    %11 = vsyncpa [#allocation6], 0
    %12 = vsyncpa [#allocation4], 0
    %13 = vsyncpa [#allocation9], 0
    // Predicated region
    $region2: #{tpu_custom_call.1} parent=1 // pred_check
      _
    $region3: #{tpu_custom_call.1} parent=1 // pred_check_branch
      %15 = sbr.rel (0) target = $region5
    $region4: #{tpu_custom_call.1} parent=1 // pred_region
      %s17 = ssub.s32 576, 576
      %18 = vsyncadd [#allocation3], %s17
      %s20 = sshll.u32 [#allocation2], 4
      %s21 = int_to_ptr.vmem [resolvable:$true] %s20
      %23 = dma.hbm_to_vmem [thread:$0]  %s0, 576, %s21, [#allocation3]
    $region5: #{tpu_custom_call.1} parent=1 // pred_fallthru
      _
    // Predicated region
    $region6: #{tpu_custom_call.1} parent=1 // pred_check
      _
    $region7: #{tpu_custom_call.1} parent=1 // pred_check_branch
      %25 = sbr.rel (0) target = $region9
    $region8: #{tpu_custom_call.1} parent=1 // pred_region
      %s27 = ssub.s32 128, 128
      %28 = vsyncadd [#allocation6], %s27
      %s30 = sshll.u32 [#allocation5], 4
      %s31 = int_to_ptr.vmem [resolvable:$true] %s30
      %33 = dma.hbm_to_vmem [thread:$0]  %s1, 128, %s31, [#allocation6]
    $region9: #{tpu_custom_call.1} parent=1 // pred_fallthru
      _
    // Predicated region
    $region10: #{tpu_custom_call.1} parent=1 // pred_check
      _
    $region11: #{tpu_custom_call.1} parent=1 // pred_check_branch
      %35 = sbr.rel (0) target = $region13
    $region12: #{tpu_custom_call.1} parent=1 // pred_region
      %36 = dma.done [#allocation3], 576
    $region13: #{tpu_custom_call.1} parent=1 // pred_fallthru
      _
    // Predicated region
    $region14: #{tpu_custom_call.1} parent=1 // pred_check
      _
    $region15: #{tpu_custom_call.1} parent=1 // pred_check_branch
      %38 = sbr.rel (0) target = $region17
    $region16: #{tpu_custom_call.1} parent=1 // pred_region
      %39 = dma.done [#allocation6], 128
    $region17: #{tpu_custom_call.1} parent=1 // pred_fallthru
      _
    %v40 = vld [vmem:[#allocation2] sm:$0xf]
    %v41 = vld [vmem:[#allocation2 + $0x4] sm:$0xf]
    %v42 = vld [vmem:[#allocation5] sm:$0xf]
    %v43 = vadd.f32 %v41, %v42
    %v44 = vld [vmem:[#allocation2 + $0x8] sm:$0xf]
    %v45 = vld [vmem:[#allocation5 + $0x4] sm:$0xf]
    %v46 = vadd.f32 %v44, %v45
    %v47 = vld [vmem:[#allocation2 + $0xc] sm:$0xf]
    %v48 = vld [vmem:[#allocation2 + $0x10] sm:$0xf]
    %v49 = vand.u32 2147483647, %v40
    %v50 = vsub.f32 0.0, %v49
    %v51 = vmul.f32 %v50, 1.442695
    %v52 = vpow.pop %v51
    %v53 = vadd.f32 %v52, 1.0
    %v54 = vrcp.pop %v53
    %vm55 = vcmp.ge.f32.partialorder %v40, 0.0
    %v56 = vmul.f32 %v52, %v54
    %v57 = vsel %vm55, %v54, %v56
    %v60 = vunpack.c.l.s4 1983009808
    %v61 = vunpack.c.0.s8 %v60
    %v62 = vlaneseq
    %v63 = vshrl.u32 %v62, 7
    %v64 = vsub.s32 %v61, %v63
    %v65 = vrot.slane %v57, %v64
    %v66 = vcombine.high %v65, %v65
    %vm69 = vcmask 1041408
    %v70 = vsel %vm69, %v65, 0.0
    %v71 = vsel %vm69, %v66, 0.0
    %v72 = vadd.f32 %v70, %v71
    %73 = vadd.xlane.f32.xlu0 %v72
    %v74 = vpop.xlane.xlu0 %73
    %v75 = vrcp.pop %v74
    %v78 = vunpack.c.l.s4 269488144
    %v79 = vunpack.c.0.s8 %v78
    %v80 = vlaneseq
    %v81 = vshrl.u32 %v80, 7
    %v82 = vsub.s32 %v79, %v81
    %v83 = vrot.slane %v75, %v82
    %v85 = vmul.f32 %v57, %v83
    %86 = vst [vmem:[#allocation7] sm:$0xf] %v85
    %v87 = vmul.f32 %v47, 0.5
    %v88 = vmul.f32 %v48, 0.5
    %v89 = vsub.f32 %v43, %v87
    %90 = vst [vmem:[#allocation8] sm:$0xf] %v89
    %v91 = vsub.f32 %v46, %v88
    %92 = vst [vmem:[#allocation8 + $0x4] sm:$0xf] %v91
    %v93 = vadd.f32 %v43, %v87
    %94 = vst [vmem:[#allocation8 + $0x8] sm:$0xf] %v93
    %v95 = vadd.f32 %v46, %v88
    %96 = vst [vmem:[#allocation8 + $0xc] sm:$0xf] %v95
    %v97 = vld [vmem:[#allocation2 + $0x14] sm:$0xf]
    %v98 = vmax.f32 %v97, 0.0
    %v99 = vand.u32 2147483647, %v97
    %v100 = vsub.f32 0.0, %v99
    %v101 = vmul.f32 %v100, 1.442695
    %v102 = vpow.pop %v101
    %v103 = vadd.f32 %v102, 1.0
    %v104 = vlog2.pop %v103
    %v105 = vmul.f32 %v104, 0.6931472
    %v106 = vadd.f32 %v98, %v105
    %v107 = vmul.f32 %v47, 0.05
    %v108 = vmax.f32 %v106, %v107
    %109 = vst [vmem:[#allocation10] sm:$0xf] %v108
    %v110 = vld [vmem:[#allocation2 + $0x18] sm:$0xf]
    %v111 = vmax.f32 %v110, 0.0
    %v112 = vand.u32 2147483647, %v110
    %v113 = vsub.f32 0.0, %v112
    %v114 = vmul.f32 %v113, 1.442695
    %v115 = vpow.pop %v114
    %v116 = vadd.f32 %v115, 1.0
    %v117 = vlog2.pop %v116
    %v118 = vmul.f32 %v117, 0.6931472
    %v119 = vadd.f32 %v111, %v118
    %v120 = vmul.f32 %v48, 0.05
    %v121 = vmax.f32 %v119, %v120
    %122 = vst [vmem:[#allocation10 + $0x4] sm:$0xf] %v121
    %v123 = vld [vmem:[#allocation2 + $0x1c] sm:$0xf]
    %v124 = vmax.f32 %v123, 0.0
    %v125 = vand.u32 2147483647, %v123
    %v126 = vsub.f32 0.0, %v125
    %v127 = vmul.f32 %v126, 1.442695
    %v128 = vpow.pop %v127
    %v129 = vadd.f32 %v128, 1.0
    %v130 = vlog2.pop %v129
    %v131 = vmul.f32 %v130, 0.6931472
    %v132 = vadd.f32 %v124, %v131
    %v133 = vmax.f32 %v132, %v107
    %134 = vst [vmem:[#allocation10 + $0x8] sm:$0xf] %v133
    %v135 = vld [vmem:[#allocation2 + $0x20] sm:$0xf]
    %v136 = vmax.f32 %v135, 0.0
    %v137 = vand.u32 2147483647, %v135
    %v138 = vsub.f32 0.0, %v137
    %v139 = vmul.f32 %v138, 1.442695
    %v140 = vpow.pop %v139
    %v141 = vadd.f32 %v140, 1.0
    %v142 = vlog2.pop %v141
    %v143 = vmul.f32 %v142, 0.6931472
    %v144 = vadd.f32 %v136, %v143
    %v145 = vmax.f32 %v144, %v120
    %146 = vst [vmem:[#allocation10 + $0xc] sm:$0xf] %v145
    // Predicated region
    $region18: #{tpu_custom_call.1} parent=1 // pred_check
      _
    $region19: #{tpu_custom_call.1} parent=1 // pred_check_branch
      %148 = sbr.rel (0) target = $region21
    $region20: #{tpu_custom_call.1} parent=1 // pred_region
      %s150 = ssub.s32 64, 64
      %151 = vsyncadd [#allocation4], %s150
      %s153 = sshll.u32 [#allocation7], 4
      %s154 = int_to_ptr.vmem [resolvable:$true] %s153
      %156 = dma.vmem_to_hbm [thread:$0]  %s154, 64, %s2, [#allocation4]
    $region21: #{tpu_custom_call.1} parent=1 // pred_fallthru
      _
    // Predicated region
    $region22: #{tpu_custom_call.1} parent=1 // pred_check
      _
    $region23: #{tpu_custom_call.1} parent=1 // pred_check_branch
      %158 = sbr.rel (0) target = $region25
    $region24: #{tpu_custom_call.1} parent=1 // pred_region
      %s160 = ssub.s32 256, 256
      %161 = vsyncadd [#allocation9], %s160
      %s163 = sshll.u32 [#allocation8], 4
      %s164 = int_to_ptr.vmem [resolvable:$true] %s163
      %166 = dma.vmem_to_hbm [thread:$0]  %s164, 256, %s3, [#allocation9]
    $region25: #{tpu_custom_call.1} parent=1 // pred_fallthru
      _
    // Predicated region
    $region26: #{tpu_custom_call.1} parent=1 // pred_check
      _
    $region27: #{tpu_custom_call.1} parent=1 // pred_check_branch
      %168 = sbr.rel (0) target = $region29
    $region28: #{tpu_custom_call.1} parent=1 // pred_region
      %s170 = ssub.s32 256, 256
      %171 = vsyncadd [#allocation9], %s170
      %s173 = sshll.u32 [#allocation10], 4
      %s174 = int_to_ptr.vmem [resolvable:$true] %s173
      %176 = dma.vmem_to_hbm [thread:$0]  %s174, 256, %s4, [#allocation9]
    $region29: #{tpu_custom_call.1} parent=1 // pred_fallthru
      _
    // Predicated region
    $region30: #{tpu_custom_call.1} parent=1 // pred_check
      _
    $region31: #{tpu_custom_call.1} parent=1 // pred_check_branch
      %178 = sbr.rel (0) target = $region33
    $region32: #{tpu_custom_call.1} parent=1 // pred_region
      %179 = dma.done [#allocation4], 64
    $region33: #{tpu_custom_call.1} parent=1 // pred_fallthru
      _
    // Predicated region
    $region34: #{tpu_custom_call.1} parent=1 // pred_check
      _
    $region35: #{tpu_custom_call.1} parent=1 // pred_check_branch
      %181 = sbr.rel (0) target = $region37
    $region36: #{tpu_custom_call.1} parent=1 // pred_region
      %182 = dma.done [#allocation9], 256
    $region37: #{tpu_custom_call.1} parent=1 // pred_fallthru
      _
    // Predicated region
    $region38: #{tpu_custom_call.1} parent=1 // pred_check
      _
    $region39: #{tpu_custom_call.1} parent=1 // pred_check_branch
      %184 = sbr.rel (0) target = $region41
    $region40: #{tpu_custom_call.1} parent=1 // pred_region
      %185 = dma.done [#allocation9], 256
    $region41: #{tpu_custom_call.1} parent=1 // pred_fallthru
      _
    %186 = vsyncpa [#allocation3], 1
    %187 = vsyncpa [#allocation6], 1
    %188 = vsyncpa [#allocation4], 1
    %189 = vsyncpa [#allocation9], 1

</llo_original>
